<compile_context>
chip_gen: v5e
topology: v5e:2x2
jax: 0.10.0
libtpu: 0.0.40
codegen_flags: <defaults>
</compile_context>

<pallas_src>
import jax
import jax.numpy as jnp
from jax.experimental import pallas as pl
from jax.experimental.pallas import tpu as pltpu

POLY_COEFF = 5.0   # coefficient for the polygon L1 loss ("l1_poly")
CLS_COEFF = 2.0    # coefficient for the classification BCE loss ("bce")
BIG = 1e9          # soft "already used" penalty for the greedy matcher
NEG_OFF = 2.0      # matcher cost is >= -1 (poly cost >= 0, -prob >= -1); offset keeps keys > 0


# ---------------------------------------------------------------------------
# Fused kernel: cost rows + greedy matcher + poly-L1 loss + BCE loss (BB images per grid step)
# ---------------------------------------------------------------------------
def _fused_loss_kernel(pred_ref, tgt_ref, logit_ref, out_ref):
    # pred_ref:  (1, D, L)     lane-packed predictions, L = BB*Q (query index fastest)
    # tgt_ref:   (1, T, D, BB) targets transposed for per-target (D, BB) column pulls
    # logit_ref: (1, 1, L)     lane-packed class logits
    # out_ref:   (1, 1, 128)   lane 0 = sum_b per-image poly loss, lane 1 = sum_b per-image BCE
    _, D, L = pred_ref.shape
    T = tgt_ref.shape[1]
    BB = tgt_ref.shape[3]
    Q = L // BB

    pred = pred_ref[0]                                   # (D, L), D on sublanes, BB*Q on lanes
    logits = logit_ref[0].reshape(BB, Q)                 # (BB, Q)   (no-op relayout when BB == 1)
    prob = jax.nn.sigmoid(logits)                        # matcher class term

    inv_D = 1.0 / D
    inv_T = 1.0 / T

    # ---- cost rows: independent of matcher state, so computed OFF the serial chain ----
    # row_t[b, q] = mean_d |pred[b, q, d] - tgt[b, t, d]|  (one (D,?) lane-broadcast per target,
    # one sublane reduce over D; no (Q,T,D) intermediate, no VMEM scratch)
    cost_rows = []
    for t in range(T):                                   # static unroll, T known at trace time
        col = tgt_ref[0, t]                              # (D, BB): single column pull per target
        if BB == 1:
            diff = jnp.abs(pred - col)                   # (D, L): (D,1) broadcast across lanes
        else:
            col_e = jnp.broadcast_to(col[:, :, None], (D, BB, Q)).reshape(D, L)
            diff = jnp.abs(pred - col_e)                 # per-image segment broadcast
        row = jnp.sum(diff, axis=0, keepdims=True) * inv_D   # (1, L): sublane reduce over D
        cost_rows.append(row.reshape(BB, Q))             # (BB, Q); no-op when BB == 1

    # ---- greedy matcher: serial only over T; all BB images handled per step ----
    # TODO(synk): true Hungarian assignment (scipy linear_sum_assignment) is sequential and
    # data-dependent with no clean Pallas equivalent; greedy per-target argmin is used
    # (duplicate assignments possible if T > Q; BIG is a soft mask, safe for O(1) costs).
    lane_iota = jax.lax.broadcasted_iota(jnp.int32, (BB, Q), 1)
    idx_bits = max(1, (Q - 1).bit_length())              # bits needed to carry the lane index
    idx_mask = (1 << idx_bits) - 1

    used = jnp.zeros((BB, Q), jnp.float32)               # doubles as the BCE target vector
    poly_acc = jnp.zeros((BB, 1), jnp.float32)
    for t in range(T):
        row = cost_rows[t]                               # (BB, Q) poly-only mean L1
        masked = row - prob + used * BIG                 # matcher cost + used-query penalty (>= -1)
        # fused value+index argmin: bitcast positive-float key to int32 (order preserving),
        # stash the lane index in the low bits, one int-min gives both value and index.
        key_i = pltpu.bitcast(masked + NEG_OFF, jnp.int32)
        key = (key_i & jnp.int32(~idx_mask)) | lane_iota
        kmin = jnp.min(key, axis=-1, keepdims=True)      # (BB, 1): one reduce, all images at once
        q_idx = kmin & idx_mask                          # matched query per image
        onehot = (lane_iota == q_idx).astype(jnp.float32)              # (BB, Q)
        poly_acc = poly_acc + jnp.sum(row * onehot, axis=-1, keepdims=True)
        used = jnp.maximum(used, onehot)

    poly_per_img = poly_acc * inv_T                      # (BB, 1) mean matched L1 per image

    # ---- BCE-with-logits over all queries; targets = matched-query mask ----
    x = logits
    y = used
    bce = jnp.maximum(x, 0.0) - x * y + jnp.log1p(jnp.exp(-jnp.abs(x)))
    cls_per_img = jnp.mean(bce, axis=-1, keepdims=True)  # (BB, 1)

    poly_sum = jnp.sum(poly_per_img)                     # sum over the BB images of this step
    cls_sum = jnp.sum(cls_per_img)

    lane128 = jax.lax.broadcasted_iota(jnp.int32, (1, 1, 128), 2)
    out_ref[...] = jnp.where(lane128 == 0, poly_sum,
                             jnp.where(lane128 == 1, cls_sum, 0.0))


def fused_losses(pred_packed, tgt_packed, logits_packed):
    """pred_packed: (G, D, BB*Q)  tgt_packed: (G, T, D, BB)  logits_packed: (G, 1, BB*Q)
       -> (G, 1, 128) with poly loss in lane 0 and BCE loss in lane 1 (per grid step)."""
    G, D, L = pred_packed.shape
    T, BB = tgt_packed.shape[1], tgt_packed.shape[3]
    return pl.pallas_call(
        _fused_loss_kernel,
        out_shape=jax.ShapeDtypeStruct((G, 1, 128), jnp.float32),
        grid=(G,),
        in_specs=[
            pl.BlockSpec((1, D, L), lambda g: (g, 0, 0)),
            pl.BlockSpec((1, T, D, BB), lambda g: (g, 0, 0, 0)),
            pl.BlockSpec((1, 1, L), lambda g: (g, 0, 0)),
        ],
        out_specs=pl.BlockSpec((1, 1, 128), lambda g: (g, 0, 0)),
        compiler_params=pltpu.CompilerParams(dimension_semantics=("parallel",)),
    )(pred_packed, tgt_packed, logits_packed)


# ---------------------------------------------------------------------------
# Wrapper: LossManager.forward (enc_polys=None, dn_polys=None path)
# ---------------------------------------------------------------------------
def loss_manager_forward(pred_polys, class_logits, targets):
    """pred_polys: (B, Q, P, 2), class_logits: (B, Q), targets: (B, T, P, 2) (all non-empty)."""
    B, Q, P, _ = pred_polys.shape
    T = targets.shape[1]
    D = P * 2

    # Grid policy: 2-way batch split for v7x megacore when possible; everything else of the
    # batch is folded INTO each grid step and packed along the lane axis (BB*Q lanes).
    G = 2 if (B >= 2 and B % 2 == 0) else 1
    BB = B // G
    L = BB * Q

    pred = pred_polys.reshape(B, Q, D).astype(jnp.float32)
    # lane-packed pred: pred_packed[g, d, b*Q + q] = pred[g*BB + b, q, d]
    # TODO(synk): this single wrapper-side transpose could be folded into the kernel (in-kernel
    # vxpose) to avoid one extra HBM round trip of pred once B*Q*D grows large.
    pred_packed = pred.reshape(G, BB, Q, D).transpose(0, 3, 1, 2).reshape(G, D, L)
    # targets transposed so the matcher pulls one (D, BB) column per target
    tgt_packed = (targets.reshape(B, T, D).astype(jnp.float32)
                  .reshape(G, BB, T, D).transpose(0, 2, 3, 1))            # (G, T, D, BB)
    logits_packed = class_logits.astype(jnp.float32).reshape(G, 1, L)     # (G, 1, BB*Q)

    out = fused_losses(pred_packed, tgt_packed, logits_packed)            # (G, 1, 128)

    poly_loss_sum = jnp.sum(out[:, 0, 0])   # sum over batch of per-image mean matched L1
    cls_loss_sum = jnp.sum(out[:, 0, 1])    # sum over batch of per-image BCE
    total_loss = POLY_COEFF * poly_loss_sum + CLS_COEFF * cls_loss_sum

    losses_dict = {
        "l1_poly": poly_loss_sum,
        "bce": cls_loss_sum,
        "total_loss": total_loss,
    }
    # TODO(synk): enc_polys / dn_polys auxiliary branches (and IOUAwareLoss) are not exercised
    # here (forward called with enc_polys=None, dn_polys=None).
    return total_loss, losses_dict


if __name__ == "__main__":
    key = jax.random.PRNGKey(0)
    k1, k2, k3 = jax.random.split(key, 3)

    B, Q, T, P = 2, 8, 4, 16   # batch, queries, targets per image, polygon points
    pred_polys = jax.random.uniform(k1, (B, Q, P, 2), dtype=jnp.float32)
    targets = jax.random.uniform(k2, (B, T, P, 2), dtype=jnp.float32)
    class_logits = jax.random.normal(k3, (B, Q), dtype=jnp.float32)

    total, losses = jax.jit(loss_manager_forward)(pred_polys, class_logits, targets)
    jax.block_until_ready(total)
    jax.block_until_ready(losses["total_loss"])
    print("KERNEL_OK")
</pallas_src>

<mosaic_0001>
module attributes {stable_mosaic.version = 11 : i64} {
  func.func @_fused_loss_kernel(%arg0: i32, %arg1: memref<1x32x8xf32, #tpu.memory_space<vmem>>, %arg2: memref<1x4x32x1xf32, #tpu.memory_space<vmem>>, %arg3: memref<1x1x8xf32, #tpu.memory_space<vmem>>, %arg4: memref<1x1x128xf32, #tpu.memory_space<vmem>>) attributes {dimension_semantics = [#tpu.dimension_semantics<parallel>], iteration_bounds = array<i64: 2>, scalar_prefetch = 0 : i64, scratch_operands = 0 : i64, tpu.core_type = #tpu.core_type<tc>, window_params = [{transform_indices = @transform_0, window_bounds = array<i64: 1, 32, 8>}, {transform_indices = @transform_1, window_bounds = array<i64: 1, 4, 32, 1>}, {transform_indices = @transform_2, window_bounds = array<i64: 1, 1, 8>}, {transform_indices = @transform_3, window_bounds = array<i64: 1, 1, 128>}]} {
    %c0 = arith.constant 0 : index
    %c0_0 = arith.constant 0 : index
    %c0_1 = arith.constant 0 : index
    %0 = vector.load %arg1[%c0, %c0_0, %c0_1] : memref<1x32x8xf32, #tpu.memory_space<vmem>>, vector<1x32x8xf32>
    %1 = vector.shape_cast %0 : vector<1x32x8xf32> to vector<32x8xf32>
    %c0_2 = arith.constant 0 : index
    %c0_3 = arith.constant 0 : index
    %c0_4 = arith.constant 0 : index
    %2 = vector.load %arg3[%c0_2, %c0_3, %c0_4] : memref<1x1x8xf32, #tpu.memory_space<vmem>>, vector<1x1x8xf32>
    %3 = vector.shape_cast %2 : vector<1x1x8xf32> to vector<1x8xf32>
    %4 = arith.negf %3 : vector<1x8xf32>
    %5 = math.exp %4 : vector<1x8xf32>
    %cst = arith.constant 1.000000e+00 : f32
    %6 = vector.broadcast %cst : f32 to vector<1x8xf32>
    %7 = arith.addf %6, %5 : vector<1x8xf32>
    %8 = arith.divf %6, %7 : vector<1x8xf32>
    %c0_5 = arith.constant 0 : index
    %c0_6 = arith.constant 0 : index
    %c0_7 = arith.constant 0 : index
    %c0_8 = arith.constant 0 : index
    %9 = vector.load %arg2[%c0_5, %c0_6, %c0_7, %c0_8] : memref<1x4x32x1xf32, #tpu.memory_space<vmem>>, vector<1x1x32x1xf32>
    %10 = vector.shape_cast %9 : vector<1x1x32x1xf32> to vector<32x1xf32>
    %11 = vector.broadcast %10 : vector<32x1xf32> to vector<32x8xf32>
    %12 = arith.subf %1, %11 : vector<32x8xf32>
    %13 = math.absf %12 : vector<32x8xf32>
    %cst_9 = arith.constant dense<0.000000e+00> : vector<8xf32>
    %14 = vector.multi_reduction <add>, %13, %cst_9 [0] : vector<32x8xf32> to vector<8xf32>
    %15 = vector.shape_cast %14 : vector<8xf32> to vector<1x8xf32>
    %cst_10 = arith.constant 3.125000e-02 : f32
    %16 = vector.broadcast %cst_10 : f32 to vector<1x8xf32>
    %17 = arith.mulf %15, %16 : vector<1x8xf32>
    %c0_11 = arith.constant 0 : index
    %c1 = arith.constant 1 : index
    %c0_12 = arith.constant 0 : index
    %c0_13 = arith.constant 0 : index
    %18 = vector.load %arg2[%c0_11, %c1, %c0_12, %c0_13] : memref<1x4x32x1xf32, #tpu.memory_space<vmem>>, vector<1x1x32x1xf32>
    %19 = vector.shape_cast %18 : vector<1x1x32x1xf32> to vector<32x1xf32>
    %20 = vector.broadcast %19 : vector<32x1xf32> to vector<32x8xf32>
    %21 = arith.subf %1, %20 : vector<32x8xf32>
    %22 = math.absf %21 : vector<32x8xf32>
    %cst_14 = arith.constant dense<0.000000e+00> : vector<8xf32>
    %23 = vector.multi_reduction <add>, %22, %cst_14 [0] : vector<32x8xf32> to vector<8xf32>
    %24 = vector.shape_cast %23 : vector<8xf32> to vector<1x8xf32>
    %cst_15 = arith.constant 3.125000e-02 : f32
    %25 = vector.broadcast %cst_15 : f32 to vector<1x8xf32>
    %26 = arith.mulf %24, %25 : vector<1x8xf32>
    %c0_16 = arith.constant 0 : index
    %c2 = arith.constant 2 : index
    %c0_17 = arith.constant 0 : index
    %c0_18 = arith.constant 0 : index
    %27 = vector.load %arg2[%c0_16, %c2, %c0_17, %c0_18] : memref<1x4x32x1xf32, #tpu.memory_space<vmem>>, vector<1x1x32x1xf32>
    %28 = vector.shape_cast %27 : vector<1x1x32x1xf32> to vector<32x1xf32>
    %29 = vector.broadcast %28 : vector<32x1xf32> to vector<32x8xf32>
    %30 = arith.subf %1, %29 : vector<32x8xf32>
    %31 = math.absf %30 : vector<32x8xf32>
    %cst_19 = arith.constant dense<0.000000e+00> : vector<8xf32>
    %32 = vector.multi_reduction <add>, %31, %cst_19 [0] : vector<32x8xf32> to vector<8xf32>
    %33 = vector.shape_cast %32 : vector<8xf32> to vector<1x8xf32>
    %cst_20 = arith.constant 3.125000e-02 : f32
    %34 = vector.broadcast %cst_20 : f32 to vector<1x8xf32>
    %35 = arith.mulf %33, %34 : vector<1x8xf32>
    %c0_21 = arith.constant 0 : index
    %c3 = arith.constant 3 : index
    %c0_22 = arith.constant 0 : index
    %c0_23 = arith.constant 0 : index
    %36 = vector.load %arg2[%c0_21, %c3, %c0_22, %c0_23] : memref<1x4x32x1xf32, #tpu.memory_space<vmem>>, vector<1x1x32x1xf32>
    %37 = vector.shape_cast %36 : vector<1x1x32x1xf32> to vector<32x1xf32>
    %38 = vector.broadcast %37 : vector<32x1xf32> to vector<32x8xf32>
    %39 = arith.subf %1, %38 : vector<32x8xf32>
    %40 = math.absf %39 : vector<32x8xf32>
    %cst_24 = arith.constant dense<0.000000e+00> : vector<8xf32>
    %41 = vector.multi_reduction <add>, %40, %cst_24 [0] : vector<32x8xf32> to vector<8xf32>
    %42 = vector.shape_cast %41 : vector<8xf32> to vector<1x8xf32>
    %cst_25 = arith.constant 3.125000e-02 : f32
    %43 = vector.broadcast %cst_25 : f32 to vector<1x8xf32>
    %44 = arith.mulf %42, %43 : vector<1x8xf32>
    %45 = tpu.iota {dimensions = array<i32: 1>} : vector<1x8xi32>
    %cst_26 = arith.constant 0.000000e+00 : f32
    %46 = vector.broadcast %cst_26 : f32 to vector<1x8xf32>
    %cst_27 = arith.constant 0.000000e+00 : f32
    %47 = vector.broadcast %cst_27 : f32 to vector<1x1xf32>
    %48 = arith.subf %17, %8 : vector<1x8xf32>
    %cst_28 = arith.constant 1.000000e+09 : f32
    %49 = vector.broadcast %cst_28 : f32 to vector<1x8xf32>
    %50 = arith.mulf %46, %49 : vector<1x8xf32>
    %51 = arith.addf %48, %50 : vector<1x8xf32>
    %cst_29 = arith.constant 2.000000e+00 : f32
    %52 = vector.broadcast %cst_29 : f32 to vector<1x8xf32>
    %53 = arith.addf %51, %52 : vector<1x8xf32>
    %54 = tpu.bitcast %53 : vector<1x8xf32> -> vector<1x8xi32>
    %c-8_i32 = arith.constant -8 : i32
    %55 = vector.broadcast %c-8_i32 : i32 to vector<1x8xi32>
    %56 = arith.andi %54, %55 : vector<1x8xi32>
    %57 = arith.ori %56, %45 : vector<1x8xi32>
    %cst_30 = arith.constant dense<2147483647> : vector<1xi32>
    %58 = vector.multi_reduction <minsi>, %57, %cst_30 [1] : vector<1x8xi32> to vector<1xi32>
    %59 = vector.shape_cast %58 : vector<1xi32> to vector<1x1xi32>
    %c7_i32 = arith.constant 7 : i32
    %60 = vector.broadcast %c7_i32 : i32 to vector<1x1xi32>
    %61 = arith.andi %59, %60 : vector<1x1xi32>
    %62 = vector.broadcast %61 : vector<1x1xi32> to vector<1x8xi32>
    %63 = arith.cmpi eq, %45, %62 : vector<1x8xi32>
    %64 = arith.extui %63 : vector<1x8xi1> to vector<1x8xi32>
    %65 = arith.sitofp %64 : vector<1x8xi32> to vector<1x8xf32>
    %66 = arith.mulf %17, %65 : vector<1x8xf32>
    %cst_31 = arith.constant dense<0.000000e+00> : vector<1xf32>
    %67 = vector.multi_reduction <add>, %66, %cst_31 [1] : vector<1x8xf32> to vector<1xf32>
    %68 = vector.shape_cast %67 : vector<1xf32> to vector<1x1xf32>
    %69 = arith.addf %47, %68 : vector<1x1xf32>
    %70 = arith.maximumf %46, %65 : vector<1x8xf32>
    %71 = arith.subf %26, %8 : vector<1x8xf32>
    %cst_32 = arith.constant 1.000000e+09 : f32
    %72 = vector.broadcast %cst_32 : f32 to vector<1x8xf32>
    %73 = arith.mulf %70, %72 : vector<1x8xf32>
    %74 = arith.addf %71, %73 : vector<1x8xf32>
    %cst_33 = arith.constant 2.000000e+00 : f32
    %75 = vector.broadcast %cst_33 : f32 to vector<1x8xf32>
    %76 = arith.addf %74, %75 : vector<1x8xf32>
    %77 = tpu.bitcast %76 : vector<1x8xf32> -> vector<1x8xi32>
    %c-8_i32_34 = arith.constant -8 : i32
    %78 = vector.broadcast %c-8_i32_34 : i32 to vector<1x8xi32>
    %79 = arith.andi %77, %78 : vector<1x8xi32>
    %80 = arith.ori %79, %45 : vector<1x8xi32>
    %cst_35 = arith.constant dense<2147483647> : vector<1xi32>
    %81 = vector.multi_reduction <minsi>, %80, %cst_35 [1] : vector<1x8xi32> to vector<1xi32>
    %82 = vector.shape_cast %81 : vector<1xi32> to vector<1x1xi32>
    %c7_i32_36 = arith.constant 7 : i32
    %83 = vector.broadcast %c7_i32_36 : i32 to vector<1x1xi32>
    %84 = arith.andi %82, %83 : vector<1x1xi32>
    %85 = vector.broadcast %84 : vector<1x1xi32> to vector<1x8xi32>
    %86 = arith.cmpi eq, %45, %85 : vector<1x8xi32>
    %87 = arith.extui %86 : vector<1x8xi1> to vector<1x8xi32>
    %88 = arith.sitofp %87 : vector<1x8xi32> to vector<1x8xf32>
    %89 = arith.mulf %26, %88 : vector<1x8xf32>
    %cst_37 = arith.constant dense<0.000000e+00> : vector<1xf32>
    %90 = vector.multi_reduction <add>, %89, %cst_37 [1] : vector<1x8xf32> to vector<1xf32>
    %91 = vector.shape_cast %90 : vector<1xf32> to vector<1x1xf32>
    %92 = arith.addf %69, %91 : vector<1x1xf32>
    %93 = arith.maximumf %70, %88 : vector<1x8xf32>
    %94 = arith.subf %35, %8 : vector<1x8xf32>
    %cst_38 = arith.constant 1.000000e+09 : f32
    %95 = vector.broadcast %cst_38 : f32 to vector<1x8xf32>
    %96 = arith.mulf %93, %95 : vector<1x8xf32>
    %97 = arith.addf %94, %96 : vector<1x8xf32>
    %cst_39 = arith.constant 2.000000e+00 : f32
    %98 = vector.broadcast %cst_39 : f32 to vector<1x8xf32>
    %99 = arith.addf %97, %98 : vector<1x8xf32>
    %100 = tpu.bitcast %99 : vector<1x8xf32> -> vector<1x8xi32>
    %c-8_i32_40 = arith.constant -8 : i32
    %101 = vector.broadcast %c-8_i32_40 : i32 to vector<1x8xi32>
    %102 = arith.andi %100, %101 : vector<1x8xi32>
    %103 = arith.ori %102, %45 : vector<1x8xi32>
    %cst_41 = arith.constant dense<2147483647> : vector<1xi32>
    %104 = vector.multi_reduction <minsi>, %103, %cst_41 [1] : vector<1x8xi32> to vector<1xi32>
    %105 = vector.shape_cast %104 : vector<1xi32> to vector<1x1xi32>
    %c7_i32_42 = arith.constant 7 : i32
    %106 = vector.broadcast %c7_i32_42 : i32 to vector<1x1xi32>
    %107 = arith.andi %105, %106 : vector<1x1xi32>
    %108 = vector.broadcast %107 : vector<1x1xi32> to vector<1x8xi32>
    %109 = arith.cmpi eq, %45, %108 : vector<1x8xi32>
    %110 = arith.extui %109 : vector<1x8xi1> to vector<1x8xi32>
    %111 = arith.sitofp %110 : vector<1x8xi32> to vector<1x8xf32>
    %112 = arith.mulf %35, %111 : vector<1x8xf32>
    %cst_43 = arith.constant dense<0.000000e+00> : vector<1xf32>
    %113 = vector.multi_reduction <add>, %112, %cst_43 [1] : vector<1x8xf32> to vector<1xf32>
    %114 = vector.shape_cast %113 : vector<1xf32> to vector<1x1xf32>
    %115 = arith.addf %92, %114 : vector<1x1xf32>
    %116 = arith.maximumf %93, %111 : vector<1x8xf32>
    %117 = arith.subf %44, %8 : vector<1x8xf32>
    %cst_44 = arith.constant 1.000000e+09 : f32
    %118 = vector.broadcast %cst_44 : f32 to vector<1x8xf32>
    %119 = arith.mulf %116, %118 : vector<1x8xf32>
    %120 = arith.addf %117, %119 : vector<1x8xf32>
    %cst_45 = arith.constant 2.000000e+00 : f32
    %121 = vector.broadcast %cst_45 : f32 to vector<1x8xf32>
    %122 = arith.addf %120, %121 : vector<1x8xf32>
    %123 = tpu.bitcast %122 : vector<1x8xf32> -> vector<1x8xi32>
    %c-8_i32_46 = arith.constant -8 : i32
    %124 = vector.broadcast %c-8_i32_46 : i32 to vector<1x8xi32>
    %125 = arith.andi %123, %124 : vector<1x8xi32>
    %126 = arith.ori %125, %45 : vector<1x8xi32>
    %cst_47 = arith.constant dense<2147483647> : vector<1xi32>
    %127 = vector.multi_reduction <minsi>, %126, %cst_47 [1] : vector<1x8xi32> to vector<1xi32>
    %128 = vector.shape_cast %127 : vector<1xi32> to vector<1x1xi32>
    %c7_i32_48 = arith.constant 7 : i32
    %129 = vector.broadcast %c7_i32_48 : i32 to vector<1x1xi32>
    %130 = arith.andi %128, %129 : vector<1x1xi32>
    %131 = vector.broadcast %130 : vector<1x1xi32> to vector<1x8xi32>
    %132 = arith.cmpi eq, %45, %131 : vector<1x8xi32>
    %133 = arith.extui %132 : vector<1x8xi1> to vector<1x8xi32>
    %134 = arith.sitofp %133 : vector<1x8xi32> to vector<1x8xf32>
    %135 = arith.mulf %44, %134 : vector<1x8xf32>
    %cst_49 = arith.constant dense<0.000000e+00> : vector<1xf32>
    %136 = vector.multi_reduction <add>, %135, %cst_49 [1] : vector<1x8xf32> to vector<1xf32>
    %137 = vector.shape_cast %136 : vector<1xf32> to vector<1x1xf32>
    %138 = arith.addf %115, %137 : vector<1x1xf32>
    %139 = arith.maximumf %116, %134 : vector<1x8xf32>
    %cst_50 = arith.constant 2.500000e-01 : f32
    %140 = vector.broadcast %cst_50 : f32 to vector<1x1xf32>
    %141 = arith.mulf %138, %140 : vector<1x1xf32>
    %cst_51 = arith.constant 0.000000e+00 : f32
    %142 = vector.broadcast %cst_51 : f32 to vector<1x8xf32>
    %143 = arith.maximumf %3, %142 : vector<1x8xf32>
    %144 = arith.mulf %3, %139 : vector<1x8xf32>
    %145 = arith.subf %143, %144 : vector<1x8xf32>
    %146 = math.absf %3 : vector<1x8xf32>
    %cst_52 = arith.constant 0.000000e+00 : f32
    %147 = vector.broadcast %cst_52 : f32 to vector<1x8xf32>
    %148 = arith.subf %147, %146 : vector<1x8xf32>
    %149 = math.exp %148 : vector<1x8xf32>
    %150 = math.log1p %149 : vector<1x8xf32>
    %151 = arith.addf %145, %150 : vector<1x8xf32>
    %cst_53 = arith.constant dense<0.000000e+00> : vector<1xf32>
    %152 = vector.multi_reduction <add>, %151, %cst_53 [1] : vector<1x8xf32> to vector<1xf32>
    %153 = vector.shape_cast %152 : vector<1xf32> to vector<1x1xf32>
    %cst_54 = arith.constant 8.000000e+00 : f32
    %154 = vector.broadcast %cst_54 : f32 to vector<1x1xf32>
    %155 = arith.divf %153, %154 : vector<1x1xf32>
    %156 = vector.shape_cast %141 : vector<1x1xf32> to vector<1x1x1xf32>
    %cst_55 = arith.constant dense<0.000000e+00> : vector<1xf32>
    %157 = vector.multi_reduction <add>, %156, %cst_55 [1, 2] : vector<1x1x1xf32> to vector<1xf32>
    %158 = vector.shape_cast %157 : vector<1xf32> to vector<1x1x1xf32>
    %159 = vector.extract %158[0, 0, 0] : f32 from vector<1x1x1xf32>
    %160 = vector.shape_cast %155 : vector<1x1xf32> to vector<1x1x1xf32>
    %cst_56 = arith.constant dense<0.000000e+00> : vector<1xf32>
    %161 = vector.multi_reduction <add>, %160, %cst_56 [1, 2] : vector<1x1x1xf32> to vector<1xf32>
    %162 = vector.shape_cast %161 : vector<1xf32> to vector<1x1x1xf32>
    %163 = vector.extract %162[0, 0, 0] : f32 from vector<1x1x1xf32>
    %164 = tpu.iota {dimensions = array<i32: 2>} : vector<1x1x128xi32>
    %c0_i32 = arith.constant 0 : i32
    %165 = vector.broadcast %c0_i32 : i32 to vector<1x1x128xi32>
    %166 = arith.cmpi eq, %164, %165 : vector<1x1x128xi32>
    %c1_i32 = arith.constant 1 : i32
    %167 = vector.broadcast %c1_i32 : i32 to vector<1x1x128xi32>
    %168 = arith.cmpi eq, %164, %167 : vector<1x1x128xi32>
    %cst_57 = arith.constant 0.000000e+00 : f32
    %169 = vector.broadcast %163 : f32 to vector<1x1x128xf32>
    %170 = vector.broadcast %cst_57 : f32 to vector<1x1x128xf32>
    %171 = arith.select %168, %169, %170 : vector<1x1x128xi1>, vector<1x1x128xf32>
    %172 = vector.broadcast %159 : f32 to vector<1x1x128xf32>
    %173 = arith.select %166, %172, %171 : vector<1x1x128xi1>, vector<1x1x128xf32>
    %c0_58 = arith.constant 0 : index
    %c0_59 = arith.constant 0 : index
    %c0_60 = arith.constant 0 : index
    %174 = vector.load %arg4[%c0_58, %c0_59, %c0_60] : memref<1x1x128xf32, #tpu.memory_space<vmem>>, vector<1x1x128xf32>
    tpu.vector_store %arg4[%c0_58, %c0_59, %c0_60], %173 {strides = array<i32>} : memref<1x1x128xf32, #tpu.memory_space<vmem>>, vector<1x1x128xf32>,
    return
  }
  func.func @transform_0(%arg0: i32) -> (i32, i32, i32) {
    %c0_i32 = arith.constant 0 : i32
    %c0_i32_0 = arith.constant 0 : i32
    %c0_i32_1 = arith.constant 0 : i32
    return %arg0, %c0_i32, %c0_i32_0 : i32, i32, i32
  }
  func.func @transform_1(%arg0: i32) -> (i32, i32, i32, i32) {
    %c0_i32 = arith.constant 0 : i32
    %c0_i32_0 = arith.constant 0 : i32
    %c0_i32_1 = arith.constant 0 : i32
    %c0_i32_2 = arith.constant 0 : i32
    return %arg0, %c0_i32, %c0_i32_0, %c0_i32_1 : i32, i32, i32, i32
  }
  func.func @transform_2(%arg0: i32) -> (i32, i32, i32) {
    %c0_i32 = arith.constant 0 : i32
    %c0_i32_0 = arith.constant 0 : i32
    %c0_i32_1 = arith.constant 0 : i32
    return %arg0, %c0_i32, %c0_i32_0 : i32, i32, i32
  }
  func.func @transform_3(%arg0: i32) -> (i32, i32, i32) {
    %c0_i32 = arith.constant 0 : i32
    %c0_i32_0 = arith.constant 0 : i32
    %c0_i32_1 = arith.constant 0 : i32
    return %arg0, %c0_i32, %c0_i32_0 : i32, i32, i32
  }
}

</mosaic_0001>

<llo_original>
// kernel: loss_manager_forward.1
$region0: #{loss_manager_forward.1}
  #allocation0 [shape = 'u32[]', space=smem, size = 0x4, offset = 0x4, fixed_abs, tag = 'smem constant byte address 0x4 - core index']
  #allocation1 [shape = 'u32[72,128]{1,0:T(1,128)}', space=vmem, size = 0x9000, scoped, tag = 'internal scratch']
  %s0 = inlined_call_operand.vmem [shape: f32[2,32,8], index: 0, kind: input, shape index: {}]
  %s1 = inlined_call_operand.vmem [shape: f32[2,4,32,1], index: 1, kind: input, shape index: {}]
  %s2 = inlined_call_operand.vmem [shape: f32[2,1,8], index: 2, kind: input, shape index: {}]
  %s3 = inlined_call_operand.vmem [shape: f32[2,1,128], index: 3, kind: output, shape index: {}]
  %s4 = sld [smem:[#allocation0]]
  $region45: #{loss_manager_forward.1} parent=0
    _
  %s6 = ssub.s32 1, %s4
  %s7 = scalar_select 0, %s6, %s4
  loop: start=0, step=1, limit=4
  $region2: #{loss_manager_forward.1} parent=0 // loop_pre_header
    _
  $region3: #{loss_manager_forward.1} parent=0 // loop_header
    %s9 = sphi 0, %s13
    %p10 = scmp.ge.s32.totalorder %s9, 4
    %s19 = sphi 0, %s21
    %s22 = sphi 0, %s19
    %s23 = sphi 0, %s22
    %s39 = sphi 0, %s23
    %s45 = sphi 0, %s47
    %s48 = sphi 0, %s45
    %s49 = sphi 0, %s48
    %s65 = sphi 0, %s49
    %s71 = sphi 0, %s73
    %s74 = sphi 0, %s71
    %s75 = sphi 0, %s74
    %s91 = sphi 0, %s75
    %s97 = sphi 0, %s99
    %s100 = sphi 0, %s97
    %s101 = sphi 0, %s100
    %s117 = sphi 0, %s101
  $region4: #{loss_manager_forward.1} parent=0 // loop_header_branch
    %12 = sbr.rel (%p10) target = $region8
  $region5: #{loss_manager_forward.1} parent=0 // loop_body
    %s14 = ssub.s32 %s9, 1
    %s15 = ssub.s32 %s9, 2
    %s16 = sadd.s32 %s9, 1
    %s17 = ssub.s32 %s9, %s16
    %p18 = scmp.eq.s32.totalorder %s17, 0
    %s20 = sadd.s32 %s19, 1
    %s21 = scalar_select %p18, %s19, %s20
    %p24 = pneg %p18
    %p25 = scmp.eq.s32.totalorder %s9, 1
    %p26 = por %p24, %p25
    %p27 = scmp.ne.s32.totalorder %s19, %s22
    %p28 = scmp.eq.s32.totalorder %s9, 0
    %p29 = por %p27, %p28
    %p30 = scmp.ne.s32.totalorder %s19, %s22
    %p31 = scmp.eq.s32.totalorder %s14, 1
    %p32 = por %p30, %p31
    %p33 = scmp.ne.s32.totalorder %s22, %s23
    %p34 = scmp.eq.s32.totalorder %s14, 0
    %p35 = por %p33, %p34
    %p36 = scmp.ne.s32.totalorder %s22, %s23
    %p37 = scmp.eq.s32.totalorder %s15, 1
    %p38 = por %p36, %p37
    %p40 = scmp.ne.s32.totalorder %s23, %s39
    %p41 = scmp.eq.s32.totalorder %s15, 0
    %p42 = por %p40, %p41
    %s43 = ssub.s32 %s9, %s16
    %p44 = scmp.eq.s32.totalorder %s43, 0
    %s46 = sadd.s32 %s45, 1
    %s47 = scalar_select %p44, %s45, %s46
    %p50 = pneg %p44
    %p51 = scmp.eq.s32.totalorder %s9, 1
    %p52 = por %p50, %p51
    %p53 = scmp.ne.s32.totalorder %s45, %s48
    %p54 = scmp.eq.s32.totalorder %s9, 0
    %p55 = por %p53, %p54
    %p56 = scmp.ne.s32.totalorder %s45, %s48
    %p57 = scmp.eq.s32.totalorder %s14, 1
    %p58 = por %p56, %p57
    %p59 = scmp.ne.s32.totalorder %s48, %s49
    %p60 = scmp.eq.s32.totalorder %s14, 0
    %p61 = por %p59, %p60
    %p62 = scmp.ne.s32.totalorder %s48, %s49
    %p63 = scmp.eq.s32.totalorder %s15, 1
    %p64 = por %p62, %p63
    %p66 = scmp.ne.s32.totalorder %s49, %s65
    %p67 = scmp.eq.s32.totalorder %s15, 0
    %p68 = por %p66, %p67
    %s69 = ssub.s32 %s9, %s16
    %p70 = scmp.eq.s32.totalorder %s69, 0
    %s72 = sadd.s32 %s71, 1
    %s73 = scalar_select %p70, %s71, %s72
    %p76 = pneg %p70
    %p77 = scmp.eq.s32.totalorder %s9, 1
    %p78 = por %p76, %p77
    %p79 = scmp.ne.s32.totalorder %s71, %s74
    %p80 = scmp.eq.s32.totalorder %s9, 0
    %p81 = por %p79, %p80
    %p82 = scmp.ne.s32.totalorder %s71, %s74
    %p83 = scmp.eq.s32.totalorder %s14, 1
    %p84 = por %p82, %p83
    %p85 = scmp.ne.s32.totalorder %s74, %s75
    %p86 = scmp.eq.s32.totalorder %s14, 0
    %p87 = por %p85, %p86
    %p88 = scmp.ne.s32.totalorder %s74, %s75
    %p89 = scmp.eq.s32.totalorder %s15, 1
    %p90 = por %p88, %p89
    %p92 = scmp.ne.s32.totalorder %s75, %s91
    %p93 = scmp.eq.s32.totalorder %s15, 0
    %p94 = por %p92, %p93
    %s95 = ssub.s32 %s9, %s16
    %p96 = scmp.eq.s32.totalorder %s95, 0
    %s98 = sadd.s32 %s97, 1
    %s99 = scalar_select %p96, %s97, %s98
    %p102 = pneg %p96
    %p103 = scmp.eq.s32.totalorder %s9, 1
    %p104 = por %p102, %p103
    %p105 = scmp.ne.s32.totalorder %s97, %s100
    %p106 = scmp.eq.s32.totalorder %s9, 0
    %p107 = por %p105, %p106
    %p108 = scmp.ne.s32.totalorder %s97, %s100
    %p109 = scmp.eq.s32.totalorder %s14, 1
    %p110 = por %p108, %p109
    %p111 = scmp.ne.s32.totalorder %s100, %s101
    %p112 = scmp.eq.s32.totalorder %s14, 0
    %p113 = por %p111, %p112
    %p114 = scmp.ne.s32.totalorder %s100, %s101
    %p115 = scmp.eq.s32.totalorder %s15, 1
    %p116 = por %p114, %p115
    %p118 = scmp.ne.s32.totalorder %s101, %s117
    %p119 = scmp.eq.s32.totalorder %s15, 0
    %p120 = por %p118, %p119
    %p121 = scmp.le.s32.totalorder 1, %s9
    %p122 = scmp.lt.s32.totalorder %s9, 3
    %p123 = pnand %p121, %p122
    %p124 = pneg %p123
    // Predicated region
    $region9: #{loss_manager_forward.1} parent=5 // pred_check
      _
    $region10: #{loss_manager_forward.1} parent=5 // pred_check_branch
      %126 = sbr.rel (%p123) target = $region12
    $region11: #{loss_manager_forward.1} parent=5 // pred_region
      %s127 = ssub.s32 %s9, 1
    $region12: #{loss_manager_forward.1} parent=5 // pred_fallthru
      _
    %p128 = scmp.lt.s32.totalorder %s9, 2
    // Predicated region
    $region13: #{loss_manager_forward.1} parent=5 // pred_check
      %p129 = pneg %p128
    $region14: #{loss_manager_forward.1} parent=5 // pred_check_branch
      %131 = sbr.rel (%p129) target = $region16
    $region15: #{loss_manager_forward.1} parent=5 // pred_region
      // Predicated region
      $region17: #{loss_manager_forward.1} parent=15 // pred_check
        %p132 = pneg %p29
      $region18: #{loss_manager_forward.1} parent=15 // pred_check_branch
        %134 = sbr.rel (%p132) target = $region20
      $region19: #{loss_manager_forward.1} parent=15 // pred_region
        %p135 = scmp.lt.s32.totalorder %s9, 1
        %s136 = scalar_select %p135, %s9, 1
        %s137 = smul.addr %s136, 4
        %s138 = smul.addr %s137, 8
        %s139 = scalar_lea.vmem %s0, %s138
      $region20: #{loss_manager_forward.1} parent=15 // pred_fallthru
        _
      // Predicated region
      $region21: #{loss_manager_forward.1} parent=15 // pred_check
        %p140 = pneg %p55
      $region22: #{loss_manager_forward.1} parent=15 // pred_check_branch
        %142 = sbr.rel (%p140) target = $region24
      $region23: #{loss_manager_forward.1} parent=15 // pred_region
        %p143 = scmp.lt.s32.totalorder %s9, 1
        %s144 = scalar_select %p143, %s9, 1
        %s145 = smul.addr %s144, 16
        %s146 = smul.addr %s145, 8
        %s147 = scalar_lea.vmem %s1, %s146
      $region24: #{loss_manager_forward.1} parent=15 // pred_fallthru
        _
      // Predicated region
      $region25: #{loss_manager_forward.1} parent=15 // pred_check
        %p148 = pneg %p81
      $region26: #{loss_manager_forward.1} parent=15 // pred_check_branch
        %150 = sbr.rel (%p148) target = $region28
      $region27: #{loss_manager_forward.1} parent=15 // pred_region
        %p151 = scmp.lt.s32.totalorder %s9, 1
        %s152 = scalar_select %p151, %s9, 1
        %s153 = scalar_lea.vmem %s2, %s152
      $region28: #{loss_manager_forward.1} parent=15 // pred_fallthru
        _
    $region16: #{loss_manager_forward.1} parent=5 // pred_fallthru
      _
    %p154 = scmp.le.s32.totalorder 1, %s9
    %p155 = scmp.lt.s32.totalorder %s9, 3
    %p156 = pnand %p154, %p155
    %p157 = pneg %p156
    // Predicated region
    $region29: #{loss_manager_forward.1} parent=5 // pred_check
      _
    $region30: #{loss_manager_forward.1} parent=5 // pred_check_branch
      %159 = sbr.rel (%p156) target = $region32
    $region31: #{loss_manager_forward.1} parent=5 // pred_region
      %s160 = ssub.s32 %s9, 1
      %p161 = scmp.lt.s32.totalorder %s14, 1
      %s162 = scalar_select %p161, %s14, 1
      %s163 = smul.addr %s162, 4
      %s164 = smul.addr %s163, 8
      %s165 = scalar_lea.vmem %s0, %s164
      %p166 = pneg %p35
      %p167 = pneg %p32
      %p168 = scmp.lt.s32.totalorder %s14, 1
      %s169 = scalar_select %p168, %s14, 1
      %s170 = smul.addr %s169, 16
      %s171 = smul.addr %s170, 8
      %s172 = scalar_lea.vmem %s1, %s171
      %p173 = pneg %p61
      %p174 = pneg %p58
      %p175 = scmp.lt.s32.totalorder %s14, 1
      %s176 = scalar_select %p175, %s14, 1
      %s177 = scalar_lea.vmem %s2, %s176
      %p178 = pneg %p87
      %p179 = pneg %p84
      %p180 = pneg %p113
      %p181 = pneg %p110
      %p182 = scmp.lt.s32.totalorder %s14, 1
      %s183 = scalar_select %p182, %s14, 1
      %s184 = scalar_lea.vmem %s3, %s183
      %p185 = scmp.lt.s32.totalorder %s14, 1
      %s186 = scalar_select %p185, %s14, 1
      %s187 = smul.addr %s186, 4
      %s188 = smul.addr %s187, 8
      %s189 = scalar_lea.vmem %s0, %s188
      %p190 = scmp.lt.s32.totalorder %s14, 1
      %s191 = scalar_select %p190, %s14, 1
      %s192 = smul.addr %s191, 16
      %s193 = smul.addr %s192, 8
      %s194 = scalar_lea.vmem %s1, %s193
      %p195 = scmp.lt.s32.totalorder %s14, 1
      %s196 = scalar_select %p195, %s14, 1
      %s197 = scalar_lea.vmem %s2, %s196
      %p198 = scmp.lt.s32.totalorder %s14, 1
      %s199 = scalar_select %p198, %s14, 1
      %s200 = scalar_lea.vmem %s3, %s199
      %v201 = vld [vmem:[%s189] sm:$0xff]
      %v202 = vld [vmem:[%s189 + $0x8] sm:$0xff]
      %v203 = vld [vmem:[%s189 + $0x10] sm:$0xff]
      %v204 = vld [vmem:[%s189 + $0x18] sm:$0xff]
      %v205 = vld [vmem:[%s197] sm:$0x1]
      %v206 = vxor.u32 %v205, 2147483648
      %v207 = vmul.f32 %v206, 1.442695
      %v208 = vpow.pop %v207
      %v209 = vadd.f32 %v208, 1.0
      %v210 = vrcp.pop %v209
      %v211 = vmul.f32 %v209, %v210
      %v212 = vsub.f32 1.0, %v211
      %v213 = vmul.f32 %v210, %v212
      %v214 = vadd.f32 %v210, %v213
      %vm215 = vweird.f32 %v209
      %vm216 = vweird.f32 %v210
      %vm217 = vmor %vm215, %vm216
      %v218 = vsel %vm217, %v210, %v214
      %v219 = vand.u32 2147483647, %v209
      %vm220 = vcmp.eq.f32.partialorder %v219, 8.507059e+37
      %v221 = vand.u32 %v209, 2147483648
      %v222 = vor.u32 1.1754944e-38, %v221
      %v223 = vsel %vm220, %v222, %v218
      %v224 = vmul.f32 1.0, %v223
      %v225 = vld [vmem:[%s194] sm:$0xff]
      %v226 = vld [vmem:[%s194 + $0x8] sm:$0xff]
      %v227 = vld [vmem:[%s194 + $0x10] sm:$0xff]
      %v228 = vld [vmem:[%s194 + $0x18] sm:$0xff]
      %230 = vset.pattern.permute.xlu0 0
      %231 = vperm.xlu0 %230, %v225
      %v232 = vpop.permute.xlu0 %231
      %235 = vset.pattern.permute.xlu0 0
      %236 = vperm.xlu0 %235, %v226
      %v237 = vpop.permute.xlu0 %236
      %240 = vset.pattern.permute.xlu0 0
      %241 = vperm.xlu0 %240, %v227
      %v242 = vpop.permute.xlu0 %241
      %245 = vset.pattern.permute.xlu0 0
      %246 = vperm.xlu0 %245, %v228
      %v247 = vpop.permute.xlu0 %246
      %v249 = vsub.f32 %v201, %v232
      %v250 = vsub.f32 %v202, %v237
      %v251 = vsub.f32 %v203, %v242
      %v252 = vsub.f32 %v204, %v247
      %v253 = vand.u32 2147483647, %v249
      %v254 = vand.u32 2147483647, %v250
      %v255 = vand.u32 2147483647, %v251
      %v256 = vand.u32 2147483647, %v252
      %vm257 = vcmask 64512
      %v258 = vsel %vm257, %v253, 0.0
      %v259 = vsel %vm257, %v254, 0.0
      %v260 = vadd.f32 %v258, %v259
      %v261 = vsel %vm257, %v255, 0.0
      %v262 = vadd.f32 %v260, %v261
      %v263 = vsel %vm257, %v256, 0.0
      %v264 = vadd.f32 %v262, %v263
      %v265 = vrot.slane %v264, 4
      %v266 = vadd.f32 %v264, %v265
      %v267 = vrot.slane %v266, 2
      %v268 = vadd.f32 %v266, %v267
      %v269 = vrot.slane %v268, 1
      %v270 = vadd.f32 %v268, %v269
      %v271 = vmul.f32 %v270, 0.03125
      %s272 = scalar_lea.vmem %s194, 32
      %v273 = vld [vmem:[%s272] sm:$0xff]
      %v274 = vld [vmem:[%s272 + $0x8] sm:$0xff]
      %v275 = vld [vmem:[%s272 + $0x10] sm:$0xff]
      %v276 = vld [vmem:[%s272 + $0x18] sm:$0xff]
      %278 = vset.pattern.permute.xlu0 0
      %279 = vperm.xlu0 %278, %v273
      %v280 = vpop.permute.xlu0 %279
      %283 = vset.pattern.permute.xlu0 0
      %284 = vperm.xlu0 %283, %v274
      %v285 = vpop.permute.xlu0 %284
      %288 = vset.pattern.permute.xlu0 0
      %289 = vperm.xlu0 %288, %v275
      %v290 = vpop.permute.xlu0 %289
      %293 = vset.pattern.permute.xlu0 0
      %294 = vperm.xlu0 %293, %v276
      %v295 = vpop.permute.xlu0 %294
      %v297 = vsub.f32 %v201, %v280
      %v298 = vsub.f32 %v202, %v285
      %v299 = vsub.f32 %v203, %v290
      %v300 = vsub.f32 %v204, %v295
      %v301 = vand.u32 2147483647, %v297
      %v302 = vand.u32 2147483647, %v298
      %v303 = vand.u32 2147483647, %v299
      %v304 = vand.u32 2147483647, %v300
      %v305 = vsel %vm257, %v301, 0.0
      %v306 = vsel %vm257, %v302, 0.0
      %v307 = vadd.f32 %v305, %v306
      %v308 = vsel %vm257, %v303, 0.0
      %v309 = vadd.f32 %v307, %v308
      %v310 = vsel %vm257, %v304, 0.0
      %v311 = vadd.f32 %v309, %v310
      %v312 = vrot.slane %v311, 4
      %v313 = vadd.f32 %v311, %v312
      %v314 = vrot.slane %v313, 2
      %v315 = vadd.f32 %v313, %v314
      %v316 = vrot.slane %v315, 1
      %v317 = vadd.f32 %v315, %v316
      %v318 = vmul.f32 %v317, 0.03125
      %s319 = scalar_lea.vmem %s194, 64
      %v320 = vld [vmem:[%s319] sm:$0xff]
      %v321 = vld [vmem:[%s319 + $0x8] sm:$0xff]
      %v322 = vld [vmem:[%s319 + $0x10] sm:$0xff]
      %v323 = vld [vmem:[%s319 + $0x18] sm:$0xff]
      %325 = vset.pattern.permute.xlu0 0
      %326 = vperm.xlu0 %325, %v320
      %v327 = vpop.permute.xlu0 %326
      %330 = vset.pattern.permute.xlu0 0
      %331 = vperm.xlu0 %330, %v321
      %v332 = vpop.permute.xlu0 %331
      %335 = vset.pattern.permute.xlu0 0
      %336 = vperm.xlu0 %335, %v322
      %v337 = vpop.permute.xlu0 %336
      %340 = vset.pattern.permute.xlu0 0
      %341 = vperm.xlu0 %340, %v323
      %v342 = vpop.permute.xlu0 %341
      %v344 = vsub.f32 %v201, %v327
      %v345 = vsub.f32 %v202, %v332
      %v346 = vsub.f32 %v203, %v337
      %v347 = vsub.f32 %v204, %v342
      %v348 = vand.u32 2147483647, %v344
      %v349 = vand.u32 2147483647, %v345
      %v350 = vand.u32 2147483647, %v346
      %v351 = vand.u32 2147483647, %v347
      %v352 = vsel %vm257, %v348, 0.0
      %v353 = vsel %vm257, %v349, 0.0
      %v354 = vadd.f32 %v352, %v353
      %v355 = vsel %vm257, %v350, 0.0
      %v356 = vadd.f32 %v354, %v355
      %v357 = vsel %vm257, %v351, 0.0
      %v358 = vadd.f32 %v356, %v357
      %v359 = vrot.slane %v358, 4
      %v360 = vadd.f32 %v358, %v359
      %v361 = vrot.slane %v360, 2
      %v362 = vadd.f32 %v360, %v361
      %v363 = vrot.slane %v362, 1
      %v364 = vadd.f32 %v362, %v363
      %v365 = vmul.f32 %v364, 0.03125
      %s366 = scalar_lea.vmem %s194, 96
      %v367 = vld [vmem:[%s366] sm:$0xff]
      %v368 = vld [vmem:[%s366 + $0x8] sm:$0xff]
      %v369 = vld [vmem:[%s366 + $0x10] sm:$0xff]
      %v370 = vld [vmem:[%s366 + $0x18] sm:$0xff]
      %372 = vset.pattern.permute.xlu0 0
      %373 = vperm.xlu0 %372, %v367
      %v374 = vpop.permute.xlu0 %373
      %377 = vset.pattern.permute.xlu0 0
      %378 = vperm.xlu0 %377, %v368
      %v379 = vpop.permute.xlu0 %378
      %382 = vset.pattern.permute.xlu0 0
      %383 = vperm.xlu0 %382, %v369
      %v384 = vpop.permute.xlu0 %383
      %387 = vset.pattern.permute.xlu0 0
      %388 = vperm.xlu0 %387, %v370
      %v389 = vpop.permute.xlu0 %388
      %v391 = vsub.f32 %v201, %v374
      %v392 = vsub.f32 %v202, %v379
      %v393 = vsub.f32 %v203, %v384
      %v394 = vsub.f32 %v204, %v389
      %v395 = vand.u32 2147483647, %v391
      %v396 = vand.u32 2147483647, %v392
      %v397 = vand.u32 2147483647, %v393
      %v398 = vand.u32 2147483647, %v394
      %v399 = vsel %vm257, %v395, 0.0
      %v400 = vsel %vm257, %v396, 0.0
      %v401 = vadd.f32 %v399, %v400
      %v402 = vsel %vm257, %v397, 0.0
      %v403 = vadd.f32 %v401, %v402
      %v404 = vsel %vm257, %v398, 0.0
      %v405 = vadd.f32 %v403, %v404
      %v406 = vrot.slane %v405, 4
      %v407 = vadd.f32 %v405, %v406
      %v408 = vrot.slane %v407, 2
      %v409 = vadd.f32 %v407, %v408
      %v410 = vrot.slane %v409, 1
      %v411 = vadd.f32 %v409, %v410
      %v412 = vmul.f32 %v411, 0.03125
      %v413 = vlaneseq
      %v414 = vand.u32 %v413, 127
      %v415 = vsub.f32 %v271, %v224
      %v416 = vadd.f32 %v415, 0.0
      %v417 = vadd.f32 %v416, 2.0
      %v419 = vand.u32 %v417, 4294967288
      %v420 = vor.u32 %v419, %v414
      %vm421 = vcmask 57344
      %v422 = vsel %vm421, %v420, 2147483647
      %v423 = vand.u32 %v422, 65535
      %v424 = vshra.s32 %v422, 16
      %v425 = vcvt.s32.f32 %v423
      %v426 = vcvt.s32.f32 %v424
      %427 = vmin.xlane.f32.xlu0 %v426
      %v428 = vpop.xlane.xlu0 %427
      %vm429 = vcmp.eq.f32.partialorder %v426, %v428
      %v430 = vsel %vm429, %v425, inf
      %431 = vmin.xlane.f32.xlu0 %v430
      %v432 = vpop.xlane.xlu0 %431
      %v433 = vcvt.f32.s32 %v432
      %v434 = vcvt.f32.s32 %v428
      %v435 = vshll.u32 %v434, 16
      %v436 = vadd.s32 %v435, %v433
      %v437 = vand.u32 %v436, 7
      %vm438 = vcmp.eq.s32.totalorder %v414, %v437
      %v439 = vsel %vm438, 1, 0
      %v440 = vcvt.s32.f32 %v439
      %v441 = vmul.f32 %v271, %v440
      %v442 = vsel %vm421, %v441, 0.0
      %443 = vadd.xlane.f32.xlu0 %v442
      %v444 = vpop.xlane.xlu0 %443
      %v445 = vadd.f32 %v444, 0.0
      %v446 = vmax.f32 %v440, 0.0
      %v447 = vsub.f32 %v318, %v224
      %v448 = vmul.f32 %v446, 1e+09
      %v449 = vadd.f32 %v447, %v448
      %v450 = vadd.f32 %v449, 2.0
      %v452 = vand.u32 %v450, 4294967288
      %v453 = vor.u32 %v452, %v414
      %v454 = vsel %vm421, %v453, 2147483647
      %v455 = vand.u32 %v454, 65535
      %v456 = vshra.s32 %v454, 16
      %v457 = vcvt.s32.f32 %v455
      %v458 = vcvt.s32.f32 %v456
      %459 = vmin.xlane.f32.xlu0 %v458
      %v460 = vpop.xlane.xlu0 %459
      %vm461 = vcmp.eq.f32.partialorder %v458, %v460
      %v462 = vsel %vm461, %v457, inf
      %463 = vmin.xlane.f32.xlu0 %v462
      %v464 = vpop.xlane.xlu0 %463
      %v465 = vcvt.f32.s32 %v464
      %v466 = vcvt.f32.s32 %v460
      %v467 = vshll.u32 %v466, 16
      %v468 = vadd.s32 %v467, %v465
      %v469 = vand.u32 %v468, 7
      %vm470 = vcmp.eq.s32.totalorder %v414, %v469
      %v471 = vsel %vm470, 1, 0
      %v472 = vcvt.s32.f32 %v471
      %v473 = vmul.f32 %v318, %v472
      %v474 = vsel %vm421, %v473, 0.0
      %475 = vadd.xlane.f32.xlu0 %v474
      %v476 = vpop.xlane.xlu0 %475
      %v477 = vadd.f32 %v445, %v476
      %v478 = vmax.f32 %v446, %v472
      %v479 = vsub.f32 %v365, %v224
      %v480 = vmul.f32 %v478, 1e+09
      %v481 = vadd.f32 %v479, %v480
      %v482 = vadd.f32 %v481, 2.0
      %v484 = vand.u32 %v482, 4294967288
      %v485 = vor.u32 %v484, %v414
      %v486 = vsel %vm421, %v485, 2147483647
      %v487 = vand.u32 %v486, 65535
      %v488 = vshra.s32 %v486, 16
      %v489 = vcvt.s32.f32 %v487
      %v490 = vcvt.s32.f32 %v488
      %491 = vmin.xlane.f32.xlu0 %v490
      %v492 = vpop.xlane.xlu0 %491
      %vm493 = vcmp.eq.f32.partialorder %v490, %v492
      %v494 = vsel %vm493, %v489, inf
      %495 = vmin.xlane.f32.xlu0 %v494
      %v496 = vpop.xlane.xlu0 %495
      %v497 = vcvt.f32.s32 %v496
      %v498 = vcvt.f32.s32 %v492
      %v499 = vshll.u32 %v498, 16
      %v500 = vadd.s32 %v499, %v497
      %v501 = vand.u32 %v500, 7
      %vm502 = vcmp.eq.s32.totalorder %v414, %v501
      %v503 = vsel %vm502, 1, 0
      %v504 = vcvt.s32.f32 %v503
      %v505 = vmul.f32 %v365, %v504
      %v506 = vsel %vm421, %v505, 0.0
      %507 = vadd.xlane.f32.xlu0 %v506
      %v508 = vpop.xlane.xlu0 %507
      %v509 = vadd.f32 %v477, %v508
      %v510 = vmax.f32 %v478, %v504
      %v511 = vsub.f32 %v412, %v224
      %v512 = vmul.f32 %v510, 1e+09
      %v513 = vadd.f32 %v511, %v512
      %v514 = vadd.f32 %v513, 2.0
      %v516 = vand.u32 %v514, 4294967288
      %v517 = vor.u32 %v516, %v414
      %v518 = vsel %vm421, %v517, 2147483647
      %v519 = vand.u32 %v518, 65535
      %v520 = vshra.s32 %v518, 16
      %v521 = vcvt.s32.f32 %v519
      %v522 = vcvt.s32.f32 %v520
      %523 = vmin.xlane.f32.xlu0 %v522
      %v524 = vpop.xlane.xlu0 %523
      %vm525 = vcmp.eq.f32.partialorder %v522, %v524
      %v526 = vsel %vm525, %v521, inf
      %527 = vmin.xlane.f32.xlu0 %v526
      %v528 = vpop.xlane.xlu0 %527
      %v529 = vcvt.f32.s32 %v528
      %v530 = vcvt.f32.s32 %v524
      %v531 = vshll.u32 %v530, 16
      %v532 = vadd.s32 %v531, %v529
      %v533 = vand.u32 %v532, 7
      %vm534 = vcmp.eq.s32.totalorder %v414, %v533
      %v535 = vsel %vm534, 1, 0
      %v536 = vcvt.s32.f32 %v535
      %v537 = vmul.f32 %v412, %v536
      %v538 = vsel %vm421, %v537, 0.0
      %539 = vadd.xlane.f32.xlu0 %v538
      %v540 = vpop.xlane.xlu0 %539
      %v541 = vadd.f32 %v509, %v540
      %v542 = vmax.f32 %v510, %v536
      %v543 = vmul.f32 %v541, 0.25
      %v544 = vmax.f32 %v205, 0.0
      %v545 = vmul.f32 %v205, %v542
      %v546 = vsub.f32 %v544, %v545
      %v547 = vand.u32 2147483647, %v205
      %v548 = vsub.f32 0.0, %v547
      %v549 = vmul.f32 %v548, 1.442695
      %v550 = vpow.pop %v549
      %v551 = vadd.f32 %v550, 1.0
      %v552 = vlog2.pop %v551
      %v553 = vmul.f32 %v552, 0.6931472
      %v554 = vmul.f32 -0.5, %v550
      %v555 = vadd.f32 %v554, 1.0
      %v556 = vmul.f32 %v555, %v550
      %v557 = vand.u32 2147483647, %v550
      %vm558 = vcmp.lt.f32.partialorder %v557, 0.0004427343
      %v559 = vsel %vm558, %v556, %v553
      %v560 = vadd.f32 %v546, %v559
      %v561 = vsel %vm421, %v560, 0.0
      %562 = vadd.xlane.f32.xlu0 %v561
      %v563 = vpop.xlane.xlu0 %562
      %v564 = vrcp.pop 8.0
      %v565 = vmul.f32 8.0, %v564
      %v566 = vsub.f32 1.0, %v565
      %v567 = vmul.f32 %v564, %v566
      %v568 = vadd.f32 %v564, %v567
      %vm569 = vweird.f32 %v564
      %v570 = vsel %vm569, %v564, %v568
      %v571 = vmul.f32 %v563, %v570
      %v572 = vadd.f32 %v543, 0.0
      %s573 = vtos %v572
      %v574 = vadd.f32 %v571, 0.0
      %s575 = vtos %v574
      %vm576 = vcmp.eq.s32.totalorder %v414, 0
      %vm577 = vcmp.eq.s32.totalorder %v414, 1
      %v578 = vstv %s575
      %v579 = vsel %vm577, %v578, 0.0
      %v580 = vstv %s573
      %v581 = vsel %vm576, %v580, %v579
      %582 = vst [vmem:[%s200] sm:$0x1] %v581
      %p583 = scmp.lt.s32.totalorder %s14, 1
      %s584 = scalar_select %p583, %s14, 1
      %s585 = scalar_lea.vmem %s3, %s584
      // Predicated region
      $region33: #{loss_manager_forward.1} parent=31 // pred_check
        %p586 = pneg %p110
      $region34: #{loss_manager_forward.1} parent=31 // pred_check_branch
        %588 = sbr.rel (%p586) target = $region36
      $region35: #{loss_manager_forward.1} parent=31 // pred_region
        _
      $region36: #{loss_manager_forward.1} parent=31 // pred_fallthru
        _
    $region32: #{loss_manager_forward.1} parent=5 // pred_fallthru
      _
    %p589 = scmp.le.s32.totalorder 2, %s9
    // Predicated region
    $region37: #{loss_manager_forward.1} parent=5 // pred_check
      %p590 = pneg %p589
    $region38: #{loss_manager_forward.1} parent=5 // pred_check_branch
      %592 = sbr.rel (%p590) target = $region40
    $region39: #{loss_manager_forward.1} parent=5 // pred_region
      %s593 = ssub.s32 %s9, 2
      // Predicated region
      $region41: #{loss_manager_forward.1} parent=39 // pred_check
        %p594 = pneg %p116
      $region42: #{loss_manager_forward.1} parent=39 // pred_check_branch
        %596 = sbr.rel (%p594) target = $region44
      $region43: #{loss_manager_forward.1} parent=39 // pred_region
        %p597 = scmp.lt.s32.totalorder %s15, 1
        %s598 = scalar_select %p597, %s15, 1
        %s599 = scalar_lea.vmem %s3, %s598
      $region44: #{loss_manager_forward.1} parent=39 // pred_fallthru
        _
    $region40: #{loss_manager_forward.1} parent=5 // pred_fallthru
      _
  $region6: #{loss_manager_forward.1} parent=0 // loop_footer
    %s13 = sadd.s32 1, %s9
  $region7: #{loss_manager_forward.1} parent=0 // loop_footer_branch
    %8 = sbr.rel target = $region3
  $region8: #{loss_manager_forward.1} parent=0 // loop_exit
    _

</llo_original>
